<compile_context>
chip_gen: v7x
topology: tpu7x:2x2x1
jax: 0.10.0
libtpu: 0.0.40
codegen_flags: <defaults>
</compile_context>

<pallas_src>
import jax
import jax.numpy as jnp
from jax.experimental import pallas as pl
from jax.experimental.pallas import tpu as pltpu

IN_FEATURES = 256
OUT_FEATURES = 10
N_PAD = 128          # MXU-friendly padded width for the resident weight tile
DEFAULT_TB = 2048    # batch tile (rows per grid step); ~2 MiB x-tile in f32


def _round_up(x, m):
    return (x + m - 1) // m * m


def _select_tiling(B, tb):
    """Pick (num_steps, TB, Bp) with <=8 rows of padding waste per tile."""
    n = -(-B // tb)                      # ceil(B / tb)
    if B >= 1024:                        # >=2 steps so v7x uses both TensorCores
        n = max(n, 2)
    TB = _round_up(-(-B // n), 8)        # round_up(ceil(B/n), 8)
    Bp = n * TB
    return n, TB, Bp


def linear_kernel(x_ref, wt_ref, b_ref, o_ref):
    # x_ref: (TB, 256), wt_ref: (256, 128), b_ref: (1, 128), o_ref: (TB, 10)
    acc = jnp.dot(x_ref[...], wt_ref[...], preferred_element_type=jnp.float32)
    # Store only the 10 real columns -> narrow, contiguous (TB, 10) HBM write.
    o_ref[...] = (acc + b_ref[...])[:, :OUT_FEATURES].astype(o_ref.dtype)


def prepare_params(weight, bias):
    """Hoisted per-init param prep: pre-transpose + pad once, pinned to f32.

    weight: (10, 256) PyTorch layout; bias: (10,).
    Returns wt_pad (256, 128) and b_pad (1, 128), both float32.
    """
    wt_pad = (jnp.zeros((IN_FEATURES, N_PAD), jnp.float32)
              .at[:, :OUT_FEATURES].set(weight.T.astype(jnp.float32)))
    b_pad = (jnp.zeros((1, N_PAD), jnp.float32)
             .at[:, :OUT_FEATURES].set(bias.astype(jnp.float32)))
    return wt_pad, b_pad


def digit_classifier_forward(x, wt_pad, b_pad, *, tb=DEFAULT_TB):
    """x: (B, 256) f32; wt_pad/b_pad from prepare_params().

    Returns (B, 10) f32, identical to nn.Linear(256, 10)(x).
    """
    B = x.shape[0]
    n, TB, Bp = _select_tiling(B, tb)
    if Bp != B:
        x = jnp.pad(x, ((0, Bp - B), (0, 0)))

    cost = pl.CostEstimate(
        flops=2 * Bp * IN_FEATURES * OUT_FEATURES,
        transcendentals=0,
        bytes_accessed=(Bp * IN_FEATURES + IN_FEATURES * N_PAD
                        + N_PAD + Bp * OUT_FEATURES) * 4,
    )

    out = pl.pallas_call(
        linear_kernel,
        out_shape=jax.ShapeDtypeStruct((Bp, OUT_FEATURES), jnp.float32),
        grid_spec=pltpu.PrefetchScalarGridSpec(
            num_scalar_prefetch=0,
            grid=(n,),
            in_specs=[
                pl.BlockSpec((TB, IN_FEATURES), lambda i: (i, 0)),
                pl.BlockSpec((IN_FEATURES, N_PAD), lambda i: (0, 0)),
                pl.BlockSpec((1, N_PAD), lambda i: (0, 0)),
            ],
            out_specs=pl.BlockSpec((TB, OUT_FEATURES), lambda i: (i, 0)),
        ),
        compiler_params=pltpu.CompilerParams(
            dimension_semantics=("parallel",),
        ),
        cost_estimate=cost,
    )(x, wt_pad, b_pad)

    return out if Bp == B else out[:B]


def init_params(key):
    """Deterministic init mirroring nn.Linear default (uniform ±1/sqrt(fan_in))."""
    kw, kb = jax.random.split(key)
    bound = 1.0 / jnp.sqrt(jnp.float32(IN_FEATURES))
    weight = jax.random.uniform(
        kw, (OUT_FEATURES, IN_FEATURES), jnp.float32, -bound, bound
    )
    bias = jax.random.uniform(kb, (OUT_FEATURES,), jnp.float32, -bound, bound)
    return weight, bias


if __name__ == "__main__":
    key = jax.random.PRNGKey(0)
    k_x, k_p = jax.random.split(key)

    weight, bias = init_params(k_p)
    wt_pad, b_pad = prepare_params(weight, bias)   # hoisted param prep (once)

    # Small batch (single tile, exact rows).
    B = 8
    x = jax.random.normal(k_x, (B, IN_FEATURES), jnp.float32)
    out = jax.block_until_ready(digit_classifier_forward(x, wt_pad, b_pad))
    ref = x @ weight.T + bias
    assert out.shape == (B, OUT_FEATURES)
    assert jnp.allclose(out, ref, atol=1e-5, rtol=1e-5)

    # Batch not a multiple of 8 (exercises row padding + slice-back).
    B2 = 37
    x2 = jax.random.normal(jax.random.PRNGKey(1), (B2, IN_FEATURES), jnp.float32)
    out2 = jax.block_until_ready(digit_classifier_forward(x2, wt_pad, b_pad))
    ref2 = x2 @ weight.T + bias
    assert out2.shape == (B2, OUT_FEATURES)
    assert jnp.allclose(out2, ref2, atol=1e-5, rtol=1e-5)

    # Multi-step grid path (small tb to keep shapes tiny): 3 pipelined tiles.
    B3 = 130
    x3 = jax.random.normal(jax.random.PRNGKey(2), (B3, IN_FEATURES), jnp.float32)
    out3 = jax.block_until_ready(digit_classifier_forward(x3, wt_pad, b_pad, tb=64))
    ref3 = x3 @ weight.T + bias
    assert out3.shape == (B3, OUT_FEATURES)
    assert jnp.allclose(out3, ref3, atol=1e-5, rtol=1e-5)

    print("KERNEL_OK")
</pallas_src>

<mosaic_0001>
module attributes {stable_mosaic.version = 11 : i64} {
  func.func @linear_kernel(%arg0: i32, %arg1: memref<8x256xf32, #tpu.memory_space<vmem>>, %arg2: memref<256x128xf32, #tpu.memory_space<vmem>>, %arg3: memref<1x128xf32, #tpu.memory_space<vmem>>, %arg4: memref<8x10xf32, #tpu.memory_space<vmem>>) attributes {dimension_semantics = [#tpu.dimension_semantics<parallel>], iteration_bounds = array<i64: 1>, scalar_prefetch = 0 : i64, scratch_operands = 0 : i64, tpu.core_type = #tpu.core_type<tc>, window_params = [{transform_indices = @transform_0, window_bounds = array<i64: 8, 256>}, {pipeline_mode = #tpu.pipeline_mode<synchronous>, transform_indices = @transform_1, window_bounds = array<i64: 256, 128>}, {pipeline_mode = #tpu.pipeline_mode<synchronous>, transform_indices = @transform_2, window_bounds = array<i64: 1, 128>}, {transform_indices = @transform_3, window_bounds = array<i64: 8, 10>}]} {
    %c0 = arith.constant 0 : index
    %c0_0 = arith.constant 0 : index
    %0 = vector.load %arg1[%c0, %c0_0] : memref<8x256xf32, #tpu.memory_space<vmem>>, vector<8x256xf32>
    %c0_1 = arith.constant 0 : index
    %c0_2 = arith.constant 0 : index
    %1 = vector.load %arg2[%c0_1, %c0_2] : memref<256x128xf32, #tpu.memory_space<vmem>>, vector<256x128xf32>
    %cst = arith.constant dense<0.000000e+00> : vector<8x128xf32>
    %2 = tpu.matmul %0, %1, %cst {dimension_numbers = #tpu.dot_dimension_numbers<[1], [0], [0], [1], [0, 0, 1, 1], [], []>} : vector<8x256xf32>, vector<256x128xf32>, vector<8x128xf32> -> vector<8x128xf32>
    %c0_3 = arith.constant 0 : index
    %c0_4 = arith.constant 0 : index
    %3 = vector.load %arg3[%c0_3, %c0_4] : memref<1x128xf32, #tpu.memory_space<vmem>>, vector<1x128xf32>
    %4 = vector.broadcast %3 : vector<1x128xf32> to vector<8x128xf32>
    %5 = arith.addf %2, %4 : vector<8x128xf32>
    %6 = vector.extract_strided_slice %5 {offsets = [0, 0], sizes = [8, 10], strides = [1, 1]} : vector<8x128xf32> to vector<8x10xf32>
    %c0_5 = arith.constant 0 : index
    %c0_6 = arith.constant 0 : index
    %7 = vector.load %arg4[%c0_5, %c0_6] : memref<8x10xf32, #tpu.memory_space<vmem>>, vector<8x10xf32>
    tpu.vector_store %arg4[%c0_5, %c0_6], %6 {strides = array<i32>} : memref<8x10xf32, #tpu.memory_space<vmem>>, vector<8x10xf32>,
    return
  }
  func.func @transform_0(%arg0: i32) -> (i32, i32) {
    %c0_i32 = arith.constant 0 : i32
    %c0_i32_0 = arith.constant 0 : i32
    return %arg0, %c0_i32 : i32, i32
  }
  func.func @transform_1(%arg0: i32) -> (i32, i32) {
    %c0_i32 = arith.constant 0 : i32
    %c0_i32_0 = arith.constant 0 : i32
    %c0_i32_1 = arith.constant 0 : i32
    return %c0_i32, %c0_i32_0 : i32, i32
  }
  func.func @transform_2(%arg0: i32) -> (i32, i32) {
    %c0_i32 = arith.constant 0 : i32
    %c0_i32_0 = arith.constant 0 : i32
    %c0_i32_1 = arith.constant 0 : i32
    return %c0_i32, %c0_i32_0 : i32, i32
  }
  func.func @transform_3(%arg0: i32) -> (i32, i32) {
    %c0_i32 = arith.constant 0 : i32
    %c0_i32_0 = arith.constant 0 : i32
    return %arg0, %c0_i32 : i32, i32
  }
}

</mosaic_0001>

<llo_original>
// kernel: tpu_custom_call.1
$region0: #{tpu_custom_call.1}
  #allocation0 [shape = 'u32[]', space=smem, size = 0x4, offset = 0x4, fixed_abs, tag = 'smem constant byte address 0x4 - core index']
  #allocation1 [shape = 'u32[144,128]{1,0:T(1,128)}', space=vmem, size = 0x12000, scoped, tag = 'internal scratch']
  %s0 = inlined_call_operand.hbm [shape: f32[8,256], index: 0, kind: input, shape index: {}]
  %s1 = inlined_call_operand.hbm [shape: f32[256,128], index: 1, kind: input, shape index: {}]
  %s2 = inlined_call_operand.vmem [shape: f32[1,128], index: 2, kind: input, shape index: {}]
  %s3 = inlined_call_operand.hbm [shape: f32[8,10], index: 3, kind: output, shape index: {}]
  %s4 = sld [smem:[#allocation0]]
  $region30: #{tpu_custom_call.1} parent=0
    _
  %s6 = ssub.s32 1, %s4
  %s7 = scalar_select 0, %s6, %s4
  $region1: #{tpu_custom_call.1} parent=0
    #allocation2 [shape = 'u8[8192]{0}', space=vmem, size = 0x2000, scoped, tag = 'input window, operand 0, single buffered']
    #allocation3 [shape = 's32[1]{0}', space=sflag, size = 0x4, scoped, tag = 'scoped memory for tpu_custom_call.1']
    #allocation4 [shape = 's32[1]{0}', space=sflag, size = 0x4, scoped, tag = 'scoped memory for tpu_custom_call.1']
    #allocation5 [shape = 'u8[131072]{0}', space=vmem, size = 0x20000, scoped, tag = 'input window, operand 1, single buffered']
    #allocation6 [shape = 's32[1]{0}', space=sflag, size = 0x4, scoped, tag = 'scoped memory for tpu_custom_call.1']
    #allocation7 [shape = 'u8[4096]{0}', space=vmem, size = 0x1000, scoped, tag = 'output window, operand 0, single buffered']
    %8 = vsyncpa [#allocation3], 0
    %9 = vsyncpa [#allocation6], 0
    %10 = vsyncpa [#allocation4], 0
    // Predicated region
    $region2: #{tpu_custom_call.1} parent=1 // pred_check
      _
    $region3: #{tpu_custom_call.1} parent=1 // pred_check_branch
      %12 = sbr.rel (0) target = $region5
    $region4: #{tpu_custom_call.1} parent=1 // pred_region
      %s14 = ssub.s32 256, 256
      %15 = vsyncadd [#allocation3], %s14
      %s17 = sshll.u32 [#allocation2], 4
      %s18 = int_to_ptr.vmem [resolvable:$true] %s17
      %20 = dma.hbm_to_vmem [thread:$0]  %s0, 256, %s18, [#allocation3]
    $region5: #{tpu_custom_call.1} parent=1 // pred_fallthru
      _
    // Predicated region
    $region6: #{tpu_custom_call.1} parent=1 // pred_check
      _
    $region7: #{tpu_custom_call.1} parent=1 // pred_check_branch
      %22 = sbr.rel (0) target = $region9
    $region8: #{tpu_custom_call.1} parent=1 // pred_region
      %s24 = ssub.s32 4096, 4096
      %25 = vsyncadd [#allocation6], %s24
      %s26 = sshll.u32 [#allocation5], 4
      %s27 = int_to_ptr.vmem [resolvable:$true] %s26
      %32 = dma.hbm_to_vmem [thread:$0]  %s1, 4096, %s27, [#allocation6], 128, 128, 8
    $region9: #{tpu_custom_call.1} parent=1 // pred_fallthru
      _
    // Predicated region
    $region10: #{tpu_custom_call.1} parent=1 // pred_check
      _
    $region11: #{tpu_custom_call.1} parent=1 // pred_check_branch
      %34 = sbr.rel (0) target = $region13
    $region12: #{tpu_custom_call.1} parent=1 // pred_region
      _
    $region13: #{tpu_custom_call.1} parent=1 // pred_fallthru
      _
    // Predicated region
    $region14: #{tpu_custom_call.1} parent=1 // pred_check
      _
    $region15: #{tpu_custom_call.1} parent=1 // pred_check_branch
      %36 = sbr.rel (0) target = $region17
    $region16: #{tpu_custom_call.1} parent=1 // pred_region
      %37 = dma.done [#allocation3], 256
    $region17: #{tpu_custom_call.1} parent=1 // pred_fallthru
      _
    // Predicated region
    $region18: #{tpu_custom_call.1} parent=1 // pred_check
      _
    $region19: #{tpu_custom_call.1} parent=1 // pred_check_branch
      %39 = sbr.rel (0) target = $region21
    $region20: #{tpu_custom_call.1} parent=1 // pred_region
      %40 = dma.done [#allocation6], 4096
    $region21: #{tpu_custom_call.1} parent=1 // pred_fallthru
      _
    %v41 = vld [vmem:[#allocation2] sm:$0xff]
    %v42 = vld [vmem:[#allocation2 + $0x8] sm:$0xff]
    %v43 = vld [vmem:[#allocation5] sm:$0xff]
    %v44 = vld [vmem:[#allocation5 + $0x8] sm:$0xff]
    %v45 = vld [vmem:[#allocation5 + $0x10] sm:$0xff]
    %v46 = vld [vmem:[#allocation5 + $0x18] sm:$0xff]
    %v47 = vld [vmem:[#allocation5 + $0x20] sm:$0xff]
    %v48 = vld [vmem:[#allocation5 + $0x28] sm:$0xff]
    %v49 = vld [vmem:[#allocation5 + $0x30] sm:$0xff]
    %v50 = vld [vmem:[#allocation5 + $0x38] sm:$0xff]
    %v51 = vld [vmem:[#allocation5 + $0x40] sm:$0xff]
    %v52 = vld [vmem:[#allocation5 + $0x48] sm:$0xff]
    %v53 = vld [vmem:[#allocation5 + $0x50] sm:$0xff]
    %v54 = vld [vmem:[#allocation5 + $0x58] sm:$0xff]
    %v55 = vld [vmem:[#allocation5 + $0x60] sm:$0xff]
    %v56 = vld [vmem:[#allocation5 + $0x68] sm:$0xff]
    %v57 = vld [vmem:[#allocation5 + $0x70] sm:$0xff]
    %v58 = vld [vmem:[#allocation5 + $0x78] sm:$0xff]
    %v59 = vld [vmem:[#allocation5 + $0x80] sm:$0xff]
    %v60 = vld [vmem:[#allocation5 + $0x88] sm:$0xff]
    %v61 = vld [vmem:[#allocation5 + $0x90] sm:$0xff]
    %v62 = vld [vmem:[#allocation5 + $0x98] sm:$0xff]
    %v63 = vld [vmem:[#allocation5 + $0xa0] sm:$0xff]
    %v64 = vld [vmem:[#allocation5 + $0xa8] sm:$0xff]
    %v65 = vld [vmem:[#allocation5 + $0xb0] sm:$0xff]
    %v66 = vld [vmem:[#allocation5 + $0xb8] sm:$0xff]
    %v67 = vld [vmem:[#allocation5 + $0xc0] sm:$0xff]
    %v68 = vld [vmem:[#allocation5 + $0xc8] sm:$0xff]
    %v69 = vld [vmem:[#allocation5 + $0xd0] sm:$0xff]
    %v70 = vld [vmem:[#allocation5 + $0xd8] sm:$0xff]
    %v71 = vld [vmem:[#allocation5 + $0xe0] sm:$0xff]
    %v72 = vld [vmem:[#allocation5 + $0xe8] sm:$0xff]
    %v73 = vld [vmem:[#allocation5 + $0xf0] sm:$0xff]
    %v74 = vld [vmem:[#allocation5 + $0xf8] sm:$0xff]
    %v75 = vld [vmem:[%s2] sm:$0x1]
    %v77 = vlaneseq
    %v78 = vshrl.u32 %v77, 7
    %v79 = vsub.s32 0, %v78
    %v80 = vrot.slane %v75, %v79
    %82 = vmatprep.subr.mxu0 0.0
    %83 = vmatpush1.msra.mxu0 %v43
    %84 = vmatprep.subr.mxu0 0.0
    %85 = vmatpush1.msra.mxu0 %v44
    %86 = vmatprep.subr.mxu0 0.0
    %87 = vmatpush1.msra.mxu0 %v45
    %88 = vmatprep.subr.mxu0 0.0
    %89 = vmatpush1.msra.mxu0 %v46
    %90 = vmatprep.subr.mxu0 0.0
    %91 = vmatpush1.msra.mxu0 %v47
    %92 = vmatprep.subr.mxu0 0.0
    %93 = vmatpush1.msra.mxu0 %v48
    %94 = vmatprep.subr.mxu0 0.0
    %95 = vmatpush1.msra.mxu0 %v49
    %96 = vmatprep.subr.mxu0 0.0
    %97 = vmatpush1.msra.mxu0 %v50
    %98 = vmatprep.subr.mxu0 0.0
    %99 = vmatpush1.msra.mxu0 %v51
    %100 = vmatprep.subr.mxu0 0.0
    %101 = vmatpush1.msra.mxu0 %v52
    %102 = vmatprep.subr.mxu0 0.0
    %103 = vmatpush1.msra.mxu0 %v53
    %104 = vmatprep.subr.mxu0 0.0
    %105 = vmatpush1.msra.mxu0 %v54
    %106 = vmatprep.subr.mxu0 0.0
    %107 = vmatpush1.msra.mxu0 %v55
    %108 = vmatprep.subr.mxu0 0.0
    %109 = vmatpush1.msra.mxu0 %v56
    %110 = vmatprep.subr.mxu0 0.0
    %111 = vmatpush1.msra.mxu0 %v57
    %112 = vmatprep.subr.mxu0 0.0
    %113 = vmatpush1.msra.mxu0 %v58
    %114 = vmatprep.subr.mxu0 0.0
    %115 = vmatpush1.msra.mxu0 %v59
    %116 = vmatprep.subr.mxu0 0.0
    %117 = vmatpush1.msra.mxu0 %v60
    %118 = vmatprep.subr.mxu0 0.0
    %119 = vmatpush1.msra.mxu0 %v61
    %120 = vmatprep.subr.mxu0 0.0
    %121 = vmatpush1.msra.mxu0 %v62
    %122 = vmatprep.subr.mxu0 0.0
    %123 = vmatpush1.msra.mxu0 %v63
    %124 = vmatprep.subr.mxu0 0.0
    %125 = vmatpush1.msra.mxu0 %v64
    %126 = vmatprep.subr.mxu0 0.0
    %127 = vmatpush1.msra.mxu0 %v65
    %128 = vmatprep.subr.mxu0 0.0
    %129 = vmatpush1.msra.mxu0 %v66
    %130 = vmatprep.subr.mxu0 0.0
    %131 = vmatpush1.msra.mxu0 %v67
    %132 = vmatprep.subr.mxu0 0.0
    %133 = vmatpush1.msra.mxu0 %v68
    %134 = vmatprep.subr.mxu0 0.0
    %135 = vmatpush1.msra.mxu0 %v69
    %136 = vmatprep.subr.mxu0 0.0
    %137 = vmatpush1.msra.mxu0 %v70
    %138 = vmatprep.subr.mxu0 0.0
    %139 = vmatpush1.msra.mxu0 %v71
    %140 = vmatprep.subr.mxu0 0.0
    %141 = vmatpush1.msra.mxu0 %v72
    %142 = vmatprep.subr.mxu0 0.0
    %143 = vmatpush1.msra.mxu0 %v73
    %144 = vmatprep.subr.mxu0 0.0
    %145 = vmatpush1.msra.mxu0 %v74
    %146 = vmatprep.mubr.f32.mxu0 %v42
    %147 = vmatmul.mubr.f32.gmra.mrb[0].mxu0 %v41
    %v148 = vpop.f32.mrb[0].mxu0
    %v149 = vadd.f32 %v80, %v148
    %v150 = vpop.f32.mrb[0].mxu0
    %151 = vdwg.mxu0
    %vm152 = vcmask 80896
    %153 = vst.msk [vmem:[#allocation7] sm:$0xff] %vm152, %v149
    // Predicated region
    $region22: #{tpu_custom_call.1} parent=1 // pred_check
      _
    $region23: #{tpu_custom_call.1} parent=1 // pred_check_branch
      %155 = sbr.rel (0) target = $region25
    $region24: #{tpu_custom_call.1} parent=1 // pred_region
      %s157 = ssub.s32 128, 128
      %158 = vsyncadd [#allocation4], %s157
      %s160 = sshll.u32 [#allocation7], 4
      %s161 = int_to_ptr.vmem [resolvable:$true] %s160
      %163 = dma.vmem_to_hbm [thread:$0]  %s161, 128, %s3, [#allocation4]
    $region25: #{tpu_custom_call.1} parent=1 // pred_fallthru
      _
    // Predicated region
    $region26: #{tpu_custom_call.1} parent=1 // pred_check
      _
    $region27: #{tpu_custom_call.1} parent=1 // pred_check_branch
      %165 = sbr.rel (0) target = $region29
    $region28: #{tpu_custom_call.1} parent=1 // pred_region
      %166 = dma.done [#allocation4], 128
    $region29: #{tpu_custom_call.1} parent=1 // pred_fallthru
      _
    %167 = vsyncpa [#allocation3], 1
    %168 = vsyncpa [#allocation6], 1
    %169 = vsyncpa [#allocation4], 1

</llo_original>
